<compile_context>
chip_gen: v7x
topology: tpu7x:2x2x1
jax: 0.10.0
libtpu: 0.0.40
codegen_flags: <defaults>
</compile_context>

<pallas_src>
import jax
import jax.numpy as jnp
from jax.experimental import pallas as pl
from jax.experimental.pallas import tpu as pltpu

DM = 64          # output_dim / embed_dim of the attention
H = 4            # nhead
HD = DM // H     # head dim (reference only; kernel is head-fused)


# ---------------------------------------------------------------------------
# Pallas kernel: single fused GEMM + bias for a block of TB batch rows.
# ---------------------------------------------------------------------------
def dyn_attn_kernel(x_ref, wf_ref, bf_ref, out_ref):
    out_ref[...] = (
        jnp.dot(x_ref[...], wf_ref[...], preferred_element_type=jnp.float32)
        + bf_ref[...]
    )


# ---------------------------------------------------------------------------
# Host-side folding of the PyTorch-layout parameters into one affine map.
# ---------------------------------------------------------------------------
def build_kernel_params(params):
    wp = params['proj_w'].T.astype(jnp.float32)                    # (K, DM)
    wv = params['in_proj_w'][2 * DM:3 * DM].T.astype(jnp.float32)  # (DM, DM)  V slice
    wo = params['out_proj_w'].T.astype(jnp.float32)                # (DM, DM)
    bp = params['proj_b']
    bv = params['in_proj_b'][2 * DM:3 * DM]
    bo = params['out_proj_b']
    w_fused = (wp @ wv) @ wo                                       # (K, DM)
    b_fused = (bp @ wv + bv) @ wo + bo                             # (DM,)
    return w_fused, b_fused


def _round8(n):
    return ((n + 7) // 8) * 8


def dynamic_attention(inputs, params, *, block_rows=512, vmem_budget=24 << 20):
    """inputs: list of (B, ...) float32 arrays -> (B, DM) attention output."""
    if inputs:
        x = jnp.concatenate(
            [r.reshape(r.shape[0], -1) for r in inputs], axis=-1).astype(jnp.float32)
    else:
        x = jnp.zeros((1, DM), jnp.float32)
    B, K = x.shape

    w_fused, b_fused = build_kernel_params(params)
    assert w_fused.shape[0] == K, (
        "sum(input_dims) must match the projection in_dim "
        f"(got K={K}, expected {w_fused.shape[0]})")

    # bf16 MXU operands; f32 accumulation + bias.
    x16 = x.astype(jnp.bfloat16)
    w16 = w_fused.astype(jnp.bfloat16)
    bf = b_fused.reshape(1, DM).astype(jnp.float32)

    # Minimal sublane pad (<= 7 rows) so the row-block (multiple of 8) is legal.
    rows = _round8(B)
    if rows != B:
        x16 = jnp.pad(x16, ((0, rows - B), (0, 0)))

    # Row-tile selection: aim for >= 2 blocks (v7x megacore), cap at block_rows,
    # then shrink until the per-step VMEM footprint fits the budget.
    tb = min(block_rows, max(8, _round8((rows + 1) // 2)))
    tb = min(tb, rows)

    def footprint(t):
        # x block (bf16, double-buffered) + out block (f32, double-buffered)
        # + resident weight (bf16) + bias.
        return 2 * t * K * 2 + 2 * t * DM * 4 + K * DM * 2 + DM * 4

    while tb > 8 and footprint(tb) > vmem_budget:
        tb = max(8, _round8(tb // 2))

    nblk = pl.cdiv(rows, tb)   # partial last block is masked by Pallas (no jnp.pad)

    out = pl.pallas_call(
        dyn_attn_kernel,
        out_shape=jax.ShapeDtypeStruct((rows, DM), jnp.float32),
        grid=(nblk,),
        in_specs=[
            pl.BlockSpec((tb, K), lambda b: (b, 0)),     # activations, blocked on rows
            pl.BlockSpec((K, DM), lambda b: (0, 0)),     # fused weight, resident
            pl.BlockSpec((1, DM), lambda b: (0, 0)),     # fused bias
        ],
        out_specs=pl.BlockSpec((tb, DM), lambda b: (b, 0)),
        compiler_params=pltpu.CompilerParams(
            dimension_semantics=("parallel",),
            vmem_limit_bytes=32 * 1024 * 1024,
        ),
    )(x16, w16, bf)

    return out[:B] if rows != B else out


# ---------------------------------------------------------------------------
# Parameter init (PyTorch layouts: Linear weight is (out, in)).
# ---------------------------------------------------------------------------
def init_params(key, in_dim):
    ks = jax.random.split(key, 6)
    return {
        'proj_w': jax.random.normal(ks[0], (DM, in_dim), jnp.float32) * 0.1,
        'proj_b': jax.random.normal(ks[1], (DM,), jnp.float32) * 0.1,
        'in_proj_w': jax.random.normal(ks[2], (3 * DM, DM), jnp.float32) * 0.1,
        'in_proj_b': jax.random.normal(ks[3], (3 * DM,), jnp.float32) * 0.1,
        'out_proj_w': jax.random.normal(ks[4], (DM, DM), jnp.float32) * 0.1,
        'out_proj_b': jax.random.normal(ks[5], (DM,), jnp.float32) * 0.1,
    }


# ---------------------------------------------------------------------------
# Pure-JAX reference: FULL multi-head attention (Q/K/V, 1x1 scores, softmax),
# mirroring PyTorch's nn.MultiheadAttention forward in eval mode.
# ---------------------------------------------------------------------------
def reference(inputs, params):
    if inputs:
        x = jnp.concatenate(
            [r.reshape(r.shape[0], -1) for r in inputs], axis=-1).astype(jnp.float32)
    else:
        x = jnp.zeros((1, DM), jnp.float32)
    B = x.shape[0]
    proj = x @ params['proj_w'].T + params['proj_b']                 # (B, DM)
    qkv = proj @ params['in_proj_w'].T + params['in_proj_b']         # (B, 3*DM)
    q, k, v = jnp.split(qkv, 3, axis=-1)
    qh = q.reshape(B, H, 1, HD)
    kh = k.reshape(B, H, 1, HD)
    vh = v.reshape(B, H, 1, HD)
    s = jnp.einsum('bhqd,bhkd->bhqk', qh, kh) / jnp.sqrt(float(HD))  # (B, H, 1, 1)
    a = jax.nn.softmax(s, axis=-1)
    ctx = jnp.einsum('bhqk,bhkd->bhqd', a, vh).reshape(B, DM)
    return ctx @ params['out_proj_w'].T + params['out_proj_b']


if __name__ == "__main__":
    key = jax.random.PRNGKey(0)
    kp, k1, k2, k3, k4 = jax.random.split(key, 5)

    input_dims = [4 * 8, 32]                 # flattened dims 32 + 32 = 64
    params = init_params(kp, sum(input_dims))

    # Case 1: tiny batch (B=2), single grid block.
    B = 2
    inputs = [jax.random.normal(k1, (B, 4, 8), jnp.float32),
              jax.random.normal(k2, (B, 32), jnp.float32)]
    out = jax.block_until_ready(dynamic_attention(inputs, params))
    ref = reference(inputs, params)
    assert out.shape == (B, DM)
    assert bool(jnp.all(jnp.isfinite(out)))
    assert bool(jnp.allclose(out, ref, atol=2e-2, rtol=2e-2))

    # Case 2: B=20 exercises the multi-block path with a masked partial last block.
    B2 = 20
    inputs2 = [jax.random.normal(k3, (B2, 4, 8), jnp.float32),
               jax.random.normal(k4, (B2, 32), jnp.float32)]
    out2 = jax.block_until_ready(dynamic_attention(inputs2, params))
    ref2 = reference(inputs2, params)
    assert out2.shape == (B2, DM)
    assert bool(jnp.all(jnp.isfinite(out2)))
    assert bool(jnp.allclose(out2, ref2, atol=2e-2, rtol=2e-2))

    print("KERNEL_OK")
</pallas_src>

<mosaic_0001>
module attributes {stable_mosaic.version = 11 : i64} {
  func.func @dyn_attn_kernel(%arg0: i32, %arg1: memref<8x64xbf16, #tpu.memory_space<vmem>>, %arg2: memref<64x64xbf16, #tpu.memory_space<vmem>>, %arg3: memref<1x64xf32, #tpu.memory_space<vmem>>, %arg4: memref<8x64xf32, #tpu.memory_space<vmem>>) attributes {dimension_semantics = [#tpu.dimension_semantics<parallel>], iteration_bounds = array<i64: 1>, scalar_prefetch = 0 : i64, scratch_operands = 0 : i64, tpu.core_type = #tpu.core_type<tc>, window_params = [{transform_indices = @transform_0, window_bounds = array<i64: 8, 64>}, {pipeline_mode = #tpu.pipeline_mode<synchronous>, transform_indices = @transform_1, window_bounds = array<i64: 64, 64>}, {pipeline_mode = #tpu.pipeline_mode<synchronous>, transform_indices = @transform_2, window_bounds = array<i64: 1, 64>}, {transform_indices = @transform_3, window_bounds = array<i64: 8, 64>}]} {
    %c0 = arith.constant 0 : index
    %c0_0 = arith.constant 0 : index
    %0 = vector.load %arg1[%c0, %c0_0] : memref<8x64xbf16, #tpu.memory_space<vmem>>, vector<8x64xbf16>
    %c0_1 = arith.constant 0 : index
    %c0_2 = arith.constant 0 : index
    %1 = vector.load %arg2[%c0_1, %c0_2] : memref<64x64xbf16, #tpu.memory_space<vmem>>, vector<64x64xbf16>
    %cst = arith.constant dense<0.000000e+00> : vector<8x64xf32>
    %2 = tpu.matmul %0, %1, %cst {dimension_numbers = #tpu.dot_dimension_numbers<[1], [0], [0], [1], [0, 0, 1, 1], [], []>} : vector<8x64xbf16>, vector<64x64xbf16>, vector<8x64xf32> -> vector<8x64xf32>
    %c0_3 = arith.constant 0 : index
    %c0_4 = arith.constant 0 : index
    %3 = vector.load %arg3[%c0_3, %c0_4] : memref<1x64xf32, #tpu.memory_space<vmem>>, vector<1x64xf32>
    %4 = vector.broadcast %3 : vector<1x64xf32> to vector<8x64xf32>
    %5 = arith.addf %2, %4 : vector<8x64xf32>
    %c0_5 = arith.constant 0 : index
    %c0_6 = arith.constant 0 : index
    %6 = vector.load %arg4[%c0_5, %c0_6] : memref<8x64xf32, #tpu.memory_space<vmem>>, vector<8x64xf32>
    tpu.vector_store %arg4[%c0_5, %c0_6], %5 {strides = array<i32>} : memref<8x64xf32, #tpu.memory_space<vmem>>, vector<8x64xf32>,
    return
  }
  func.func @transform_0(%arg0: i32) -> (i32, i32) {
    %c0_i32 = arith.constant 0 : i32
    %c0_i32_0 = arith.constant 0 : i32
    return %arg0, %c0_i32 : i32, i32
  }
  func.func @transform_1(%arg0: i32) -> (i32, i32) {
    %c0_i32 = arith.constant 0 : i32
    %c0_i32_0 = arith.constant 0 : i32
    %c0_i32_1 = arith.constant 0 : i32
    return %c0_i32, %c0_i32_0 : i32, i32
  }
  func.func @transform_2(%arg0: i32) -> (i32, i32) {
    %c0_i32 = arith.constant 0 : i32
    %c0_i32_0 = arith.constant 0 : i32
    %c0_i32_1 = arith.constant 0 : i32
    return %c0_i32, %c0_i32_0 : i32, i32
  }
  func.func @transform_3(%arg0: i32) -> (i32, i32) {
    %c0_i32 = arith.constant 0 : i32
    %c0_i32_0 = arith.constant 0 : i32
    return %arg0, %c0_i32 : i32, i32
  }
}

</mosaic_0001>

<llo_original>
// kernel: tpu_custom_call.1
$region0: #{tpu_custom_call.1}
  #allocation0 [shape = 'u32[]', space=smem, size = 0x4, offset = 0x4, fixed_abs, tag = 'smem constant byte address 0x4 - core index']
  #allocation1 [shape = 'u32[144,128]{1,0:T(1,128)}', space=vmem, size = 0x12000, scoped, tag = 'internal scratch']
  %s0 = inlined_call_operand.hbm [shape: bf16[8,64], index: 0, kind: input, shape index: {}]
  %s1 = inlined_call_operand.hbm [shape: bf16[64,64], index: 1, kind: input, shape index: {}]
  %s2 = inlined_call_operand.vmem [shape: f32[1,64], index: 2, kind: input, shape index: {}]
  %s3 = inlined_call_operand.hbm [shape: f32[8,64], index: 3, kind: output, shape index: {}]
  %s4 = sld [smem:[#allocation0]]
  $region30: #{tpu_custom_call.1} parent=0
    _
  %s6 = ssub.s32 1, %s4
  %s7 = scalar_select 0, %s6, %s4
  $region1: #{tpu_custom_call.1} parent=0
    #allocation2 [shape = 'u8[2048]{0}', space=vmem, size = 0x800, scoped, tag = 'input window, operand 0, single buffered']
    #allocation3 [shape = 's32[1]{0}', space=sflag, size = 0x4, scoped, tag = 'scoped memory for tpu_custom_call.1']
    #allocation4 [shape = 's32[1]{0}', space=sflag, size = 0x4, scoped, tag = 'scoped memory for tpu_custom_call.1']
    #allocation5 [shape = 'u8[16384]{0}', space=vmem, size = 0x4000, scoped, tag = 'input window, operand 1, single buffered']
    #allocation6 [shape = 's32[1]{0}', space=sflag, size = 0x4, scoped, tag = 'scoped memory for tpu_custom_call.1']
    #allocation7 [shape = 'u8[4096]{0}', space=vmem, size = 0x1000, scoped, tag = 'output window, operand 0, single buffered']
    %8 = vsyncpa [#allocation3], 0
    %9 = vsyncpa [#allocation6], 0
    %10 = vsyncpa [#allocation4], 0
    // Predicated region
    $region2: #{tpu_custom_call.1} parent=1 // pred_check
      _
    $region3: #{tpu_custom_call.1} parent=1 // pred_check_branch
      %12 = sbr.rel (0) target = $region5
    $region4: #{tpu_custom_call.1} parent=1 // pred_region
      %s14 = ssub.s32 64, 64
      %15 = vsyncadd [#allocation3], %s14
      %s17 = sshll.u32 [#allocation2], 4
      %s18 = int_to_ptr.vmem [resolvable:$true] %s17
      %20 = dma.hbm_to_vmem [thread:$0]  %s0, 64, %s18, [#allocation3]
    $region5: #{tpu_custom_call.1} parent=1 // pred_fallthru
      _
    // Predicated region
    $region6: #{tpu_custom_call.1} parent=1 // pred_check
      _
    $region7: #{tpu_custom_call.1} parent=1 // pred_check_branch
      %22 = sbr.rel (0) target = $region9
    $region8: #{tpu_custom_call.1} parent=1 // pred_region
      %s24 = ssub.s32 512, 512
      %25 = vsyncadd [#allocation6], %s24
      %s26 = sshll.u32 [#allocation5], 4
      %s27 = int_to_ptr.vmem [resolvable:$true] %s26
      %32 = dma.hbm_to_vmem [thread:$0]  %s1, 512, %s27, [#allocation6], 64, 64, 4
    $region9: #{tpu_custom_call.1} parent=1 // pred_fallthru
      _
    // Predicated region
    $region10: #{tpu_custom_call.1} parent=1 // pred_check
      _
    $region11: #{tpu_custom_call.1} parent=1 // pred_check_branch
      %34 = sbr.rel (0) target = $region13
    $region12: #{tpu_custom_call.1} parent=1 // pred_region
      _
    $region13: #{tpu_custom_call.1} parent=1 // pred_fallthru
      _
    // Predicated region
    $region14: #{tpu_custom_call.1} parent=1 // pred_check
      _
    $region15: #{tpu_custom_call.1} parent=1 // pred_check_branch
      %36 = sbr.rel (0) target = $region17
    $region16: #{tpu_custom_call.1} parent=1 // pred_region
      %37 = dma.done [#allocation3], 64
    $region17: #{tpu_custom_call.1} parent=1 // pred_fallthru
      _
    // Predicated region
    $region18: #{tpu_custom_call.1} parent=1 // pred_check
      _
    $region19: #{tpu_custom_call.1} parent=1 // pred_check_branch
      %39 = sbr.rel (0) target = $region21
    $region20: #{tpu_custom_call.1} parent=1 // pred_region
      %40 = dma.done [#allocation6], 512
    $region21: #{tpu_custom_call.1} parent=1 // pred_fallthru
      _
    %v42 = vld [vmem:[#allocation2] sm:$0xf]
    %v43 = vld [vmem:[#allocation5] sm:$0xf]
    %v44 = vld [vmem:[#allocation5 + $0x4] sm:$0xf]
    %v45 = vld [vmem:[#allocation5 + $0x8] sm:$0xf]
    %v46 = vld [vmem:[#allocation5 + $0xc] sm:$0xf]
    %v47 = vld [vmem:[#allocation5 + $0x10] sm:$0xf]
    %v48 = vld [vmem:[#allocation5 + $0x14] sm:$0xf]
    %v49 = vld [vmem:[#allocation5 + $0x18] sm:$0xf]
    %v50 = vld [vmem:[#allocation5 + $0x1c] sm:$0xf]
    %v51 = vld [vmem:[%s2] sm:$0x1]
    %v53 = vlaneseq
    %v54 = vshrl.u32 %v53, 7
    %v55 = vsub.s32 0, %v54
    %v56 = vrot.slane %v51, %v55
    %v66 = vunpack.c.l.b16 %v43
    %v67 = vunpack.c.l.b16 %v44
    %v68 = vunpack.c.l.b16 %v45
    %v69 = vunpack.c.l.b16 %v46
    %v70 = vunpack.c.l.b16 %v47
    %v71 = vunpack.c.l.b16 %v48
    %v72 = vunpack.c.l.b16 %v49
    %v73 = vunpack.c.l.b16 %v50
    %v74 = vpack.c.b16 %v67, %v66
    %v75 = vpack.c.b16 %v69, %v68
    %v76 = vpack.c.b16 %v71, %v70
    %v77 = vpack.c.b16 %v73, %v72
    %vm82 = vcmask 523264
    %v84 = vsel %vm82, %v42, 0
    %86 = vmatprep.subr.bf16.mxu0 0
    %87 = vmatpush1.bf16.msra.mxu0 %v74
    %88 = vmatprep.subr.bf16.mxu0 0
    %89 = vmatpush1.bf16.msra.mxu0 %v75
    %90 = vmatprep.subr.bf16.mxu0 0
    %91 = vmatpush1.bf16.msra.mxu0 %v76
    %92 = vmatprep.subr.bf16.mxu0 0
    %93 = vmatpush1.bf16.msra.mxu0 %v77
    %94 = vmatprep.subr.bf16.mxu0 0
    %95 = vmatpush1.bf16.msra.mxu0 0
    %96 = vmatprep.subr.bf16.mxu0 0
    %97 = vmatpush1.bf16.msra.mxu0 0
    %98 = vmatprep.subr.bf16.mxu0 0
    %99 = vmatpush1.bf16.msra.mxu0 0
    %100 = vmatprep.subr.bf16.mxu0 0
    %101 = vmatpush1.bf16.msra.mxu0 0
    %102 = vmatprep.subr.bf16.mxu0 0
    %103 = vmatpush1.bf16.msra.mxu0 0
    %104 = vmatprep.subr.bf16.mxu0 0
    %105 = vmatpush1.bf16.msra.mxu0 0
    %106 = vmatprep.subr.bf16.mxu0 0
    %107 = vmatpush1.bf16.msra.mxu0 0
    %108 = vmatprep.subr.bf16.mxu0 0
    %109 = vmatpush1.bf16.msra.mxu0 0
    %110 = vmatprep.subr.bf16.mxu0 0
    %111 = vmatpush1.bf16.msra.mxu0 0
    %112 = vmatprep.subr.bf16.mxu0 0
    %113 = vmatpush1.bf16.msra.mxu0 0
    %114 = vmatprep.subr.bf16.mxu0 0
    %115 = vmatpush1.bf16.msra.mxu0 0
    %116 = vmatprep.subr.bf16.mxu0 0
    %117 = vmatpush1.bf16.msra.mxu0 0
    %118 = vmatprep.mubr.bf16.mxu0 0
    %119 = vmatmul.mubr.bf16.gmra.mrb[0].mxu0 %v84
    %v120 = vpop.f32.mrb[0].mxu0
    %v121 = vadd.f32 %v56, %v120
    %v122 = vpop.f32.mrb[0].mxu0
    %v123 = vpop.f32.mrb[0].mxu0
    %v124 = vpop.f32.mrb[0].mxu0
    %125 = vdwg.mxu0
    %126 = vst.msk [vmem:[#allocation7] sm:$0xff] %vm82, %v121
    // Predicated region
    $region22: #{tpu_custom_call.1} parent=1 // pred_check
      _
    $region23: #{tpu_custom_call.1} parent=1 // pred_check_branch
      %128 = sbr.rel (0) target = $region25
    $region24: #{tpu_custom_call.1} parent=1 // pred_region
      %s130 = ssub.s32 128, 128
      %131 = vsyncadd [#allocation4], %s130
      %s133 = sshll.u32 [#allocation7], 4
      %s134 = int_to_ptr.vmem [resolvable:$true] %s133
      %136 = dma.vmem_to_hbm [thread:$0]  %s134, 128, %s3, [#allocation4]
    $region25: #{tpu_custom_call.1} parent=1 // pred_fallthru
      _
    // Predicated region
    $region26: #{tpu_custom_call.1} parent=1 // pred_check
      _
    $region27: #{tpu_custom_call.1} parent=1 // pred_check_branch
      %138 = sbr.rel (0) target = $region29
    $region28: #{tpu_custom_call.1} parent=1 // pred_region
      %139 = dma.done [#allocation4], 128
    $region29: #{tpu_custom_call.1} parent=1 // pred_fallthru
      _
    %140 = vsyncpa [#allocation3], 1
    %141 = vsyncpa [#allocation6], 1
    %142 = vsyncpa [#allocation4], 1

</llo_original>
